<compile_context>
chip_gen: v5e
topology: v5e:2x2
jax: 0.10.0
libtpu: 0.0.40
codegen_flags: <defaults>
</compile_context>

<pallas_src>
import functools
import math

import numpy as np
import jax
import jax.numpy as jnp
from jax.experimental import pallas as pl
from jax.experimental.pallas import tpu as pltpu

# ---- module hyper-parameters (mirror SincConv_fast.__init__) ----------------
OUT_CHANNELS = 8
KERNEL_SIZE = 8               # even -> module bumps it to 9
SAMPLE_RATE = 16000
MIN_LOW_HZ = 0.2
MIN_BAND_HZ = 2.0

K = KERNEL_SIZE + 1 if KERNEL_SIZE % 2 == 0 else KERNEL_SIZE   # actual filter length


def _to_mel(hz):
    return 2595.0 * np.log10(1.0 + hz / 700.0)


def _to_hz(mel):
    return 700.0 * (10.0 ** (mel / 2595.0) - 1.0)


def init_sinc_params():
    """Deterministic parameter init, identical to SincConv_fast.__init__."""
    low_hz = MIN_LOW_HZ
    high_hz = SAMPLE_RATE / 2 - (MIN_LOW_HZ + MIN_BAND_HZ)
    mel = np.linspace(_to_mel(low_hz), _to_mel(high_hz), OUT_CHANNELS + 1)
    hz = _to_hz(mel)
    low_hz_ = jnp.asarray(hz[:-1].reshape(-1, 1).astype(np.float32))     # (C, 1)
    band_hz_ = jnp.asarray(np.diff(hz).reshape(-1, 1).astype(np.float32))  # (C, 1)
    return low_hz_, band_hz_


def build_filters(low_hz_, band_hz_):
    """(C, K) sinc band-pass filter bank; exact math of the PyTorch forward."""
    half = K // 2
    n_lin = np.linspace(0.0, K / 2 - 1, num=half)
    window_half = 0.54 - 0.46 * np.cos(2 * math.pi * n_lin / K)
    n = (K - 1) / 2.0
    t_full = 2.0 * math.pi * (np.arange(K) - n) / SAMPLE_RATE            # center == 0
    win_full = np.concatenate([window_half, np.ones((1,)), window_half[::-1]])
    center = np.arange(K) == (K // 2)
    t_safe = np.where(center, 1.0, t_full)
    coeff_full = np.where(center, 0.0, win_full / (0.5 * t_safe))        # win / (t/2)

    t = jnp.asarray(t_full.astype(np.float32)).reshape(1, K)
    coeff = jnp.asarray(coeff_full.astype(np.float32)).reshape(1, K)
    center_j = jnp.asarray(center.reshape(1, K))

    low = MIN_LOW_HZ + jnp.abs(low_hz_)                                  # (C, 1)
    high = jnp.clip(low + MIN_BAND_HZ + jnp.abs(band_hz_),
                    MIN_LOW_HZ, SAMPLE_RATE / 2.0)                       # (C, 1)
    band = high - low                                                    # (C, 1)
    bp = (jnp.sin(high * t) - jnp.sin(low * t)) * coeff                  # (C, K)
    bp = jnp.where(center_j, 2.0 * band, bp)                             # center tap
    return (bp / (2.0 * band)).astype(jnp.float32)                       # exact divide


# ------------------------------ Pallas kernel --------------------------------
def _sinc_conv_kernel(x_ref, filt_ref, o_ref, *, C, K, W, CHUNK, chunk_starts, TB):
    # x_ref   : (1, TB, LT + 128)  -- one output-length tile of TB waveform rows
    #                                 plus a 128-sample aligned halo
    # filt_ref: (C, K)             -- sinc filter bank (built once in the wrapper)
    # o_ref   : (TB, C, LT)
    filt = filt_ref[...]                                     # (C, K)
    taps = [filt[:, k:k + 1] for k in range(K)]              # hoisted (C,1) tap coeffs

    for b in range(TB):                    # static batch block
        for s in chunk_starts:             # static, 128-aligned chunk offsets
            # one aligned window per (b, chunk); the C-way sublane broadcast of the
            # waveform is done here once instead of once per tap.
            win = jnp.broadcast_to(x_ref[0, b:b + 1, s:s + W], (C, W))   # (C, CHUNK+128)
            # per-tap operands are in-register lane shifts of `win` (no extra VMEM
            # loads); two independent accumulators break the K-long add chain.
            acc0 = taps[0] * win[:, 0:CHUNK]
            acc1 = taps[1] * win[:, 1:1 + CHUNK]
            for k in range(2, K, 2):
                acc0 = acc0 + taps[k] * win[:, k:k + CHUNK]
            for k in range(3, K, 2):
                acc1 = acc1 + taps[k] * win[:, k:k + CHUNK]
            o_ref[b, :, s:s + CHUNK] = acc0 + acc1                       # unmasked vst


def _round_up(x, m):
    return ((x + m - 1) // m) * m


def sinc_conv_fast(waveforms, low_hz_, band_hz_):
    """waveforms: (B, 1, T) float32 -> (B, OUT_CHANNELS, T - K + 1) float32."""
    B, in_ch, T = waveforms.shape
    assert in_ch == 1, "SincConv only supports one input channel"
    C = OUT_CHANNELS
    L_out = T - K + 1
    assert L_out >= 1, "waveform shorter than the filter"

    filt = build_filters(low_hz_, band_hz_)                  # (C, K)

    # ---- batch blocking (sublane axis of the input/output blocks) -----------
    if B <= 8:
        TB, B_pad = B, B                     # full batch in one block, no pad waste
    else:
        TB, B_pad = 8, _round_up(B, 8)       # see TODO(synk) at top about remainder

    # ---- output-length tiling: near-equal L tiles (parallel grid axis) ------
    l128 = _round_up(L_out, 128)                             # lane-dense output width
    n_lt = -(-l128 // 4096)                                  # number of L tiles
    LT = _round_up(-(-l128 // n_lt), 128)                    # tile width, mult. of 128
    L_pad = n_lt * LT                                        # total pad < 128 per tile
    CHUNK = min(512, LT)                                     # per-chunk acc width
    W = CHUNK + 128                                          # aligned window w/ halo
    chunk_starts = list(range(0, LT - CHUNK + 1, CHUNK))
    if chunk_starts[-1] + CHUNK < LT:                        # last chunk may overlap
        chunk_starts.append(LT - CHUNK)
    chunk_starts = tuple(chunk_starts)

    # ---- layout plumbing: squeeze channel dim, pre-slice haloed L tiles -----
    T_pad = L_pad + 128
    x2 = waveforms.reshape(B, T).astype(jnp.float32)
    x2 = jnp.pad(x2, ((0, B_pad - B), (0, T_pad - T)))
    x_tiles = jnp.stack([x2[:, j * LT:j * LT + LT + 128] for j in range(n_lt)],
                        axis=0)                              # (n_lt, B_pad, LT+128)

    in_block = TB * (LT + 128) * 4
    out_block = TB * C * LT * 4
    vmem_limit = int(min(max(2 * (in_block + out_block) + (8 << 20), 32 << 20),
                         128 << 20))

    cost = pl.CostEstimate(flops=2 * B * C * L_out * K,
                           transcendentals=0,
                           bytes_accessed=4 * (B * T + B * C * L_out + C * K))

    kernel = functools.partial(_sinc_conv_kernel, C=C, K=K, W=W, CHUNK=CHUNK,
                               chunk_starts=chunk_starts, TB=TB)
    out = pl.pallas_call(
        kernel,
        out_shape=jax.ShapeDtypeStruct((B_pad, C, L_pad), jnp.float32),
        grid=(B_pad // TB, n_lt),
        in_specs=[
            pl.BlockSpec((1, TB, LT + 128), lambda i, j: (j, i, 0)),  # haloed L tile
            pl.BlockSpec((C, K), lambda i, j: (0, 0)),                # filter bank
        ],
        out_specs=pl.BlockSpec((TB, C, LT), lambda i, j: (i, 0, j)),
        compiler_params=pltpu.CompilerParams(
            dimension_semantics=("parallel", "parallel"),
            vmem_limit_bytes=vmem_limit),
        cost_estimate=cost,
    )(x_tiles, filt)

    return out[:B, :, :L_out]


# ------------------------- plain-JAX reference (checks) ----------------------
def sinc_conv_reference(waveforms, low_hz_, band_hz_):
    """Direct jnp transcription of the PyTorch forward (for verification)."""
    low = MIN_LOW_HZ + jnp.abs(low_hz_)
    high = jnp.clip(low + MIN_BAND_HZ + jnp.abs(band_hz_),
                    MIN_LOW_HZ, SAMPLE_RATE / 2)
    band = (high - low)[:, 0]
    half = K // 2
    n_lin = np.linspace(0.0, K / 2 - 1, num=half)
    window_ = jnp.asarray((0.54 - 0.46 * np.cos(2 * math.pi * n_lin / K))
                          .astype(np.float32))
    n = (K - 1) / 2.0
    n_ = jnp.asarray((2 * math.pi * np.arange(-n, 0) / SAMPLE_RATE)
                     .astype(np.float32)).reshape(1, -1)
    f_low = jnp.matmul(low, n_)
    f_high = jnp.matmul(high, n_)
    bp_left = (jnp.sin(f_high) - jnp.sin(f_low)) / (n_ / 2) * window_
    bp_center = 2 * band.reshape(-1, 1)
    bp_right = jnp.flip(bp_left, axis=1)
    bp = jnp.concatenate([bp_left, bp_center, bp_right], axis=1)
    bp = bp / (2 * band[:, None])
    filters = bp.reshape(OUT_CHANNELS, 1, K)
    return jax.lax.conv_general_dilated(
        waveforms, filters, window_strides=(1,), padding="VALID",
        dimension_numbers=("NCH", "OIH", "NCH"))


if __name__ == "__main__":
    B, T = 2, 128
    key = jax.random.PRNGKey(0)
    waveforms = jax.random.normal(key, (B, 1, T), dtype=jnp.float32)

    low_hz_, band_hz_ = init_sinc_params()

    out = jax.block_until_ready(sinc_conv_fast(waveforms, low_hz_, band_hz_))
    ref = jax.block_until_ready(sinc_conv_reference(waveforms, low_hz_, band_hz_))

    assert out.shape == (B, OUT_CHANNELS, T - K + 1), out.shape
    max_err = float(jnp.max(jnp.abs(out - ref)))
    assert jnp.allclose(out, ref, atol=1e-3, rtol=1e-3), max_err

    print("KERNEL_OK")
</pallas_src>

<mosaic_0001>
module attributes {stable_mosaic.version = 11 : i64} {
  func.func @_sinc_conv_kernel(%arg0: i32, %arg1: i32, %arg2: memref<1x2x256xf32, #tpu.memory_space<vmem>>, %arg3: memref<8x9xf32, #tpu.memory_space<vmem>>, %arg4: memref<2x8x128xf32, #tpu.memory_space<vmem>>) attributes {dimension_semantics = [#tpu.dimension_semantics<parallel>, #tpu.dimension_semantics<parallel>], iteration_bounds = array<i64: 1, 1>, scalar_prefetch = 0 : i64, scratch_operands = 0 : i64, tpu.core_type = #tpu.core_type<tc>, window_params = [{transform_indices = @transform_0, window_bounds = array<i64: 1, 2, 256>}, {pipeline_mode = #tpu.pipeline_mode<synchronous>, transform_indices = @transform_1, window_bounds = array<i64: 8, 9>}, {transform_indices = @transform_2, window_bounds = array<i64: 2, 8, 128>}]} {
    %c0 = arith.constant 0 : index
    %c0_0 = arith.constant 0 : index
    %0 = vector.load %arg3[%c0, %c0_0] : memref<8x9xf32, #tpu.memory_space<vmem>>, vector<8x9xf32>
    %1 = vector.extract_strided_slice %0 {offsets = [0, 0], sizes = [8, 1], strides = [1, 1]} : vector<8x9xf32> to vector<8x1xf32>
    %2 = vector.extract_strided_slice %0 {offsets = [0, 1], sizes = [8, 1], strides = [1, 1]} : vector<8x9xf32> to vector<8x1xf32>
    %3 = vector.extract_strided_slice %0 {offsets = [0, 2], sizes = [8, 1], strides = [1, 1]} : vector<8x9xf32> to vector<8x1xf32>
    %4 = vector.extract_strided_slice %0 {offsets = [0, 3], sizes = [8, 1], strides = [1, 1]} : vector<8x9xf32> to vector<8x1xf32>
    %5 = vector.extract_strided_slice %0 {offsets = [0, 4], sizes = [8, 1], strides = [1, 1]} : vector<8x9xf32> to vector<8x1xf32>
    %6 = vector.extract_strided_slice %0 {offsets = [0, 5], sizes = [8, 1], strides = [1, 1]} : vector<8x9xf32> to vector<8x1xf32>
    %7 = vector.extract_strided_slice %0 {offsets = [0, 6], sizes = [8, 1], strides = [1, 1]} : vector<8x9xf32> to vector<8x1xf32>
    %8 = vector.extract_strided_slice %0 {offsets = [0, 7], sizes = [8, 1], strides = [1, 1]} : vector<8x9xf32> to vector<8x1xf32>
    %9 = vector.extract_strided_slice %0 {offsets = [0, 8], sizes = [8, 1], strides = [1, 1]} : vector<8x9xf32> to vector<8x1xf32>
    %c0_1 = arith.constant 0 : index
    %c0_2 = arith.constant 0 : index
    %c0_3 = arith.constant 0 : index
    %10 = vector.load %arg2[%c0_1, %c0_2, %c0_3] : memref<1x2x256xf32, #tpu.memory_space<vmem>>, vector<1x1x256xf32>
    %11 = vector.shape_cast %10 : vector<1x1x256xf32> to vector<1x256xf32>
    %12 = vector.shape_cast %11 : vector<1x256xf32> to vector<1x256xf32>
    %13 = vector.broadcast %12 : vector<1x256xf32> to vector<8x256xf32>
    %14 = vector.extract_strided_slice %13 {offsets = [0, 0], sizes = [8, 128], strides = [1, 1]} : vector<8x256xf32> to vector<8x128xf32>
    %15 = vector.broadcast %1 : vector<8x1xf32> to vector<8x128xf32>
    %16 = arith.mulf %15, %14 : vector<8x128xf32>
    %17 = vector.extract_strided_slice %13 {offsets = [0, 1], sizes = [8, 128], strides = [1, 1]} : vector<8x256xf32> to vector<8x128xf32>
    %18 = vector.broadcast %2 : vector<8x1xf32> to vector<8x128xf32>
    %19 = arith.mulf %18, %17 : vector<8x128xf32>
    %20 = vector.extract_strided_slice %13 {offsets = [0, 2], sizes = [8, 128], strides = [1, 1]} : vector<8x256xf32> to vector<8x128xf32>
    %21 = vector.broadcast %3 : vector<8x1xf32> to vector<8x128xf32>
    %22 = arith.mulf %21, %20 : vector<8x128xf32>
    %23 = arith.addf %16, %22 : vector<8x128xf32>
    %24 = vector.extract_strided_slice %13 {offsets = [0, 4], sizes = [8, 128], strides = [1, 1]} : vector<8x256xf32> to vector<8x128xf32>
    %25 = vector.broadcast %5 : vector<8x1xf32> to vector<8x128xf32>
    %26 = arith.mulf %25, %24 : vector<8x128xf32>
    %27 = arith.addf %23, %26 : vector<8x128xf32>
    %28 = vector.extract_strided_slice %13 {offsets = [0, 6], sizes = [8, 128], strides = [1, 1]} : vector<8x256xf32> to vector<8x128xf32>
    %29 = vector.broadcast %7 : vector<8x1xf32> to vector<8x128xf32>
    %30 = arith.mulf %29, %28 : vector<8x128xf32>
    %31 = arith.addf %27, %30 : vector<8x128xf32>
    %32 = vector.extract_strided_slice %13 {offsets = [0, 8], sizes = [8, 128], strides = [1, 1]} : vector<8x256xf32> to vector<8x128xf32>
    %33 = vector.broadcast %9 : vector<8x1xf32> to vector<8x128xf32>
    %34 = arith.mulf %33, %32 : vector<8x128xf32>
    %35 = arith.addf %31, %34 : vector<8x128xf32>
    %36 = vector.extract_strided_slice %13 {offsets = [0, 3], sizes = [8, 128], strides = [1, 1]} : vector<8x256xf32> to vector<8x128xf32>
    %37 = vector.broadcast %4 : vector<8x1xf32> to vector<8x128xf32>
    %38 = arith.mulf %37, %36 : vector<8x128xf32>
    %39 = arith.addf %19, %38 : vector<8x128xf32>
    %40 = vector.extract_strided_slice %13 {offsets = [0, 5], sizes = [8, 128], strides = [1, 1]} : vector<8x256xf32> to vector<8x128xf32>
    %41 = vector.broadcast %6 : vector<8x1xf32> to vector<8x128xf32>
    %42 = arith.mulf %41, %40 : vector<8x128xf32>
    %43 = arith.addf %39, %42 : vector<8x128xf32>
    %44 = vector.extract_strided_slice %13 {offsets = [0, 7], sizes = [8, 128], strides = [1, 1]} : vector<8x256xf32> to vector<8x128xf32>
    %45 = vector.broadcast %8 : vector<8x1xf32> to vector<8x128xf32>
    %46 = arith.mulf %45, %44 : vector<8x128xf32>
    %47 = arith.addf %43, %46 : vector<8x128xf32>
    %48 = arith.addf %35, %47 : vector<8x128xf32>
    %c0_4 = arith.constant 0 : index
    %c0_5 = arith.constant 0 : index
    %c0_6 = arith.constant 0 : index
    %49 = vector.load %arg4[%c0_4, %c0_5, %c0_6] : memref<2x8x128xf32, #tpu.memory_space<vmem>>, vector<1x8x128xf32>
    %50 = vector.shape_cast %49 : vector<1x8x128xf32> to vector<8x128xf32>
    %51 = vector.shape_cast %48 : vector<8x128xf32> to vector<1x8x128xf32>
    tpu.vector_store %arg4[%c0_4, %c0_5, %c0_6], %51 {strides = array<i32>} : memref<2x8x128xf32, #tpu.memory_space<vmem>>, vector<1x8x128xf32>,
    %c0_7 = arith.constant 0 : index
    %c1 = arith.constant 1 : index
    %c0_8 = arith.constant 0 : index
    %52 = vector.load %arg2[%c0_7, %c1, %c0_8] : memref<1x2x256xf32, #tpu.memory_space<vmem>>, vector<1x1x256xf32>
    %53 = vector.shape_cast %52 : vector<1x1x256xf32> to vector<1x256xf32>
    %54 = vector.shape_cast %53 : vector<1x256xf32> to vector<1x256xf32>
    %55 = vector.broadcast %54 : vector<1x256xf32> to vector<8x256xf32>
    %56 = vector.extract_strided_slice %55 {offsets = [0, 0], sizes = [8, 128], strides = [1, 1]} : vector<8x256xf32> to vector<8x128xf32>
    %57 = vector.broadcast %1 : vector<8x1xf32> to vector<8x128xf32>
    %58 = arith.mulf %57, %56 : vector<8x128xf32>
    %59 = vector.extract_strided_slice %55 {offsets = [0, 1], sizes = [8, 128], strides = [1, 1]} : vector<8x256xf32> to vector<8x128xf32>
    %60 = vector.broadcast %2 : vector<8x1xf32> to vector<8x128xf32>
    %61 = arith.mulf %60, %59 : vector<8x128xf32>
    %62 = vector.extract_strided_slice %55 {offsets = [0, 2], sizes = [8, 128], strides = [1, 1]} : vector<8x256xf32> to vector<8x128xf32>
    %63 = vector.broadcast %3 : vector<8x1xf32> to vector<8x128xf32>
    %64 = arith.mulf %63, %62 : vector<8x128xf32>
    %65 = arith.addf %58, %64 : vector<8x128xf32>
    %66 = vector.extract_strided_slice %55 {offsets = [0, 4], sizes = [8, 128], strides = [1, 1]} : vector<8x256xf32> to vector<8x128xf32>
    %67 = vector.broadcast %5 : vector<8x1xf32> to vector<8x128xf32>
    %68 = arith.mulf %67, %66 : vector<8x128xf32>
    %69 = arith.addf %65, %68 : vector<8x128xf32>
    %70 = vector.extract_strided_slice %55 {offsets = [0, 6], sizes = [8, 128], strides = [1, 1]} : vector<8x256xf32> to vector<8x128xf32>
    %71 = vector.broadcast %7 : vector<8x1xf32> to vector<8x128xf32>
    %72 = arith.mulf %71, %70 : vector<8x128xf32>
    %73 = arith.addf %69, %72 : vector<8x128xf32>
    %74 = vector.extract_strided_slice %55 {offsets = [0, 8], sizes = [8, 128], strides = [1, 1]} : vector<8x256xf32> to vector<8x128xf32>
    %75 = vector.broadcast %9 : vector<8x1xf32> to vector<8x128xf32>
    %76 = arith.mulf %75, %74 : vector<8x128xf32>
    %77 = arith.addf %73, %76 : vector<8x128xf32>
    %78 = vector.extract_strided_slice %55 {offsets = [0, 3], sizes = [8, 128], strides = [1, 1]} : vector<8x256xf32> to vector<8x128xf32>
    %79 = vector.broadcast %4 : vector<8x1xf32> to vector<8x128xf32>
    %80 = arith.mulf %79, %78 : vector<8x128xf32>
    %81 = arith.addf %61, %80 : vector<8x128xf32>
    %82 = vector.extract_strided_slice %55 {offsets = [0, 5], sizes = [8, 128], strides = [1, 1]} : vector<8x256xf32> to vector<8x128xf32>
    %83 = vector.broadcast %6 : vector<8x1xf32> to vector<8x128xf32>
    %84 = arith.mulf %83, %82 : vector<8x128xf32>
    %85 = arith.addf %81, %84 : vector<8x128xf32>
    %86 = vector.extract_strided_slice %55 {offsets = [0, 7], sizes = [8, 128], strides = [1, 1]} : vector<8x256xf32> to vector<8x128xf32>
    %87 = vector.broadcast %8 : vector<8x1xf32> to vector<8x128xf32>
    %88 = arith.mulf %87, %86 : vector<8x128xf32>
    %89 = arith.addf %85, %88 : vector<8x128xf32>
    %90 = arith.addf %77, %89 : vector<8x128xf32>
    %c1_9 = arith.constant 1 : index
    %c0_10 = arith.constant 0 : index
    %c0_11 = arith.constant 0 : index
    %91 = vector.load %arg4[%c1_9, %c0_10, %c0_11] : memref<2x8x128xf32, #tpu.memory_space<vmem>>, vector<1x8x128xf32>
    %92 = vector.shape_cast %91 : vector<1x8x128xf32> to vector<8x128xf32>
    %93 = vector.shape_cast %90 : vector<8x128xf32> to vector<1x8x128xf32>
    tpu.vector_store %arg4[%c1_9, %c0_10, %c0_11], %93 {strides = array<i32>} : memref<2x8x128xf32, #tpu.memory_space<vmem>>, vector<1x8x128xf32>,
    return
  }
  func.func @transform_0(%arg0: i32, %arg1: i32) -> (i32, i32, i32) {
    %c0_i32 = arith.constant 0 : i32
    %c0_i32_0 = arith.constant 0 : i32
    return %arg1, %arg0, %c0_i32 : i32, i32, i32
  }
  func.func @transform_1(%arg0: i32, %arg1: i32) -> (i32, i32) {
    %c0_i32 = arith.constant 0 : i32
    %c0_i32_0 = arith.constant 0 : i32
    %c0_i32_1 = arith.constant 0 : i32
    return %c0_i32, %c0_i32_0 : i32, i32
  }
  func.func @transform_2(%arg0: i32, %arg1: i32) -> (i32, i32, i32) {
    %c0_i32 = arith.constant 0 : i32
    %c0_i32_0 = arith.constant 0 : i32
    return %arg0, %c0_i32, %arg1 : i32, i32, i32
  }
}

</mosaic_0001>

<llo_original>
// kernel: tpu_custom_call.1
$region0: #{tpu_custom_call.1}
  #allocation0 [shape = 'u32[]', space=smem, size = 0x4, offset = 0x4, fixed_abs, tag = 'smem constant byte address 0x4 - core index']
  #allocation1 [shape = 'u32[72,128]{1,0:T(1,128)}', space=vmem, size = 0x9000, scoped, tag = 'internal scratch']
  %s0 = inlined_call_operand.hbm [shape: f32[1,2,256], index: 0, kind: input, shape index: {}]
  %s1 = inlined_call_operand.hbm [shape: f32[8,9], index: 1, kind: input, shape index: {}]
  %s2 = inlined_call_operand.hbm [shape: f32[2,8,128], index: 2, kind: output, shape index: {}]
  %s3 = sld [smem:[#allocation0]]
  $region26: #{tpu_custom_call.1} parent=0
    _
  %s5 = ssub.s32 1, %s3
  %s6 = scalar_select 0, %s5, %s3
  $region1: #{tpu_custom_call.1} parent=0
    #allocation2 [shape = 'u8[2048]{0}', space=vmem, size = 0x800, scoped, tag = 'input window, operand 0, single buffered']
    #allocation3 [shape = 's32[1]{0}', space=sflag, size = 0x4, scoped, tag = 'scoped memory for tpu_custom_call.1']
    #allocation4 [shape = 's32[1]{0}', space=sflag, size = 0x4, scoped, tag = 'scoped memory for tpu_custom_call.1']
    #allocation5 [shape = 'u8[4096]{0}', space=vmem, size = 0x1000, scoped, tag = 'input window, operand 1, single buffered']
    #allocation6 [shape = 's32[1]{0}', space=sflag, size = 0x4, scoped, tag = 'scoped memory for tpu_custom_call.1']
    #allocation7 [shape = 'u8[8192]{0}', space=vmem, size = 0x2000, scoped, tag = 'output window, operand 0, single buffered']
    %7 = vsyncpa [#allocation3], 0
    %8 = vsyncpa [#allocation6], 0
    %9 = vsyncpa [#allocation4], 0
    // Predicated region
    $region2: #{tpu_custom_call.1} parent=1 // pred_check
      _
    $region3: #{tpu_custom_call.1} parent=1 // pred_check_branch
      %11 = sbr.rel (0) target = $region5
    $region4: #{tpu_custom_call.1} parent=1 // pred_region
      %13 = vsyncadd [#allocation3], 0
      %s15 = sshll.u32 %s0, 4
      %s16 = int_to_ptr.hbm [resolvable:$true] %s15
      %s17 = sshll.u32 [#allocation2], 4
      %s18 = int_to_ptr.vmem [resolvable:$true] %s17
      %20 = dma.hbm_to_vmem [thread:$0]  %s16, 64, %s18, [#allocation3]
    $region5: #{tpu_custom_call.1} parent=1 // pred_fallthru
      _
    // Predicated region
    $region6: #{tpu_custom_call.1} parent=1 // pred_check
      _
    $region7: #{tpu_custom_call.1} parent=1 // pred_check_branch
      %22 = sbr.rel (0) target = $region9
    $region8: #{tpu_custom_call.1} parent=1 // pred_region
      %24 = vsyncadd [#allocation6], 0
      %s26 = sshll.u32 %s1, 4
      %s27 = int_to_ptr.hbm [resolvable:$true] %s26
      %s28 = sshll.u32 [#allocation5], 4
      %s29 = int_to_ptr.vmem [resolvable:$true] %s28
      %31 = dma.hbm_to_vmem [thread:$0]  %s27, 128, %s29, [#allocation6]
    $region9: #{tpu_custom_call.1} parent=1 // pred_fallthru
      _
    // Predicated region
    $region10: #{tpu_custom_call.1} parent=1 // pred_check
      _
    $region11: #{tpu_custom_call.1} parent=1 // pred_check_branch
      %33 = sbr.rel (0) target = $region13
    $region12: #{tpu_custom_call.1} parent=1 // pred_region
      %35 = dma.done [#allocation3], 64
    $region13: #{tpu_custom_call.1} parent=1 // pred_fallthru
      _
    // Predicated region
    $region14: #{tpu_custom_call.1} parent=1 // pred_check
      _
    $region15: #{tpu_custom_call.1} parent=1 // pred_check_branch
      %37 = sbr.rel (0) target = $region17
    $region16: #{tpu_custom_call.1} parent=1 // pred_region
      %39 = dma.done [#allocation6], 128
    $region17: #{tpu_custom_call.1} parent=1 // pred_fallthru
      _
    %v40 = vld [vmem:[#allocation5] sm:$0xff]
    %v41 = vld [vmem:[#allocation2] ss:$2 sm:$0x3]
    %v43 = vperm.slane %v41, 0
    %46 = vset.pattern.permute.xlu0 0
    %47 = vperm.xlu0 %46, %v40
    %v48 = vpop.permute.xlu0 %47
    %v50 = vmul.f32 %v48, %v43
    %v51 = vperm.slane %v41, 1
    %53 = vset.pattern.permute.xlu0 1
    %54 = vperm.xlu0 %53, %v40
    %v55 = vpop.permute.xlu0 %54
    %v57 = vmul.f32 %v55, %v43
    %v58 = vmul.f32 %v55, %v51
    %59 = vset.pattern.permute.xlu0 2
    %60 = vperm.xlu0 %59, %v40
    %v61 = vpop.permute.xlu0 %60
    %v63 = vmul.f32 %v61, %v43
    %v64 = vmul.f32 %v61, %v51
    %67 = vrot.lane.b32.xlu0 %v63, 126
    %v68 = vpop.permute.xlu0 %67
    %69 = vrot.lane.b32.xlu0 %v64, 126
    %v70 = vpop.permute.xlu0 %69
    %vm71 = vcmask 1031168
    %v72 = vsel %vm71, %v68, %v70
    %v74 = vadd.f32 %v50, %v72
    %75 = vset.pattern.permute.xlu0 4
    %76 = vperm.xlu0 %75, %v40
    %v77 = vpop.permute.xlu0 %76
    %v79 = vmul.f32 %v77, %v43
    %v80 = vmul.f32 %v77, %v51
    %83 = vrot.lane.b32.xlu0 %v79, 124
    %v84 = vpop.permute.xlu0 %83
    %85 = vrot.lane.b32.xlu0 %v80, 124
    %v86 = vpop.permute.xlu0 %85
    %vm87 = vcmask 1014784
    %v88 = vsel %vm87, %v84, %v86
    %v90 = vadd.f32 %v74, %v88
    %91 = vset.pattern.permute.xlu0 6
    %92 = vperm.xlu0 %91, %v40
    %v93 = vpop.permute.xlu0 %92
    %v95 = vmul.f32 %v93, %v43
    %v96 = vmul.f32 %v93, %v51
    %99 = vrot.lane.b32.xlu0 %v95, 122
    %v100 = vpop.permute.xlu0 %99
    %101 = vrot.lane.b32.xlu0 %v96, 122
    %v102 = vpop.permute.xlu0 %101
    %vm103 = vcmask 998400
    %v104 = vsel %vm103, %v100, %v102
    %v106 = vadd.f32 %v90, %v104
    %107 = vset.pattern.permute.xlu0 8
    %108 = vperm.xlu0 %107, %v40
    %v109 = vpop.permute.xlu0 %108
    %v111 = vmul.f32 %v109, %v43
    %v112 = vmul.f32 %v109, %v51
    %115 = vrot.lane.b32.xlu0 %v111, 120
    %v116 = vpop.permute.xlu0 %115
    %117 = vrot.lane.b32.xlu0 %v112, 120
    %v118 = vpop.permute.xlu0 %117
    %vm119 = vcmask 982016
    %v120 = vsel %vm119, %v116, %v118
    %v122 = vadd.f32 %v106, %v120
    %123 = vset.pattern.permute.xlu0 3
    %124 = vperm.xlu0 %123, %v40
    %v125 = vpop.permute.xlu0 %124
    %v127 = vmul.f32 %v125, %v43
    %v128 = vmul.f32 %v125, %v51
    %131 = vrot.lane.b32.xlu0 %v127, 126
    %v132 = vpop.permute.xlu0 %131
    %133 = vrot.lane.b32.xlu0 %v128, 126
    %v134 = vpop.permute.xlu0 %133
    %v135 = vsel %vm71, %v132, %v134
    %v138 = vadd.f32 %v57, %v135
    %v139 = vadd.f32 %v58, %v134
    %140 = vset.pattern.permute.xlu0 5
    %141 = vperm.xlu0 %140, %v40
    %v142 = vpop.permute.xlu0 %141
    %v144 = vmul.f32 %v142, %v43
    %v145 = vmul.f32 %v142, %v51
    %148 = vrot.lane.b32.xlu0 %v144, 124
    %v149 = vpop.permute.xlu0 %148
    %150 = vrot.lane.b32.xlu0 %v145, 124
    %v151 = vpop.permute.xlu0 %150
    %v152 = vsel %vm87, %v149, %v151
    %v155 = vadd.f32 %v138, %v152
    %v156 = vadd.f32 %v139, %v151
    %157 = vset.pattern.permute.xlu0 7
    %158 = vperm.xlu0 %157, %v40
    %v159 = vpop.permute.xlu0 %158
    %v161 = vmul.f32 %v159, %v43
    %v162 = vmul.f32 %v159, %v51
    %165 = vrot.lane.b32.xlu0 %v161, 122
    %v166 = vpop.permute.xlu0 %165
    %167 = vrot.lane.b32.xlu0 %v162, 122
    %v168 = vpop.permute.xlu0 %167
    %v169 = vsel %vm103, %v166, %v168
    %v172 = vadd.f32 %v155, %v169
    %v173 = vadd.f32 %v156, %v168
    %176 = vrot.lane.b32.xlu0 %v172, 127
    %v177 = vpop.permute.xlu0 %176
    %178 = vrot.lane.b32.xlu0 %v173, 127
    %v179 = vpop.permute.xlu0 %178
    %vm180 = vcmask 1039360
    %v181 = vsel %vm180, %v177, %v179
    %v183 = vadd.f32 %v122, %v181
    %184 = vst [vmem:[#allocation7] sm:$0xff] %v183
    %s185 = scalar_lea.vmem [#allocation2], 1
    %v186 = vld [vmem:[%s185] ss:$2 sm:$0x3]
    %v188 = vperm.slane %v186, 0
    %v190 = vmul.f32 %v48, %v188
    %v191 = vperm.slane %v186, 1
    %v193 = vmul.f32 %v55, %v188
    %v194 = vmul.f32 %v55, %v191
    %v195 = vmul.f32 %v61, %v188
    %v196 = vmul.f32 %v61, %v191
    %199 = vrot.lane.b32.xlu0 %v195, 126
    %v200 = vpop.permute.xlu0 %199
    %201 = vrot.lane.b32.xlu0 %v196, 126
    %v202 = vpop.permute.xlu0 %201
    %v203 = vsel %vm71, %v200, %v202
    %v205 = vadd.f32 %v190, %v203
    %v206 = vmul.f32 %v77, %v188
    %v207 = vmul.f32 %v77, %v191
    %210 = vrot.lane.b32.xlu0 %v206, 124
    %v211 = vpop.permute.xlu0 %210
    %212 = vrot.lane.b32.xlu0 %v207, 124
    %v213 = vpop.permute.xlu0 %212
    %v214 = vsel %vm87, %v211, %v213
    %v216 = vadd.f32 %v205, %v214
    %v217 = vmul.f32 %v93, %v188
    %v218 = vmul.f32 %v93, %v191
    %221 = vrot.lane.b32.xlu0 %v217, 122
    %v222 = vpop.permute.xlu0 %221
    %223 = vrot.lane.b32.xlu0 %v218, 122
    %v224 = vpop.permute.xlu0 %223
    %v225 = vsel %vm103, %v222, %v224
    %v227 = vadd.f32 %v216, %v225
    %v228 = vmul.f32 %v109, %v188
    %v229 = vmul.f32 %v109, %v191
    %232 = vrot.lane.b32.xlu0 %v228, 120
    %v233 = vpop.permute.xlu0 %232
    %234 = vrot.lane.b32.xlu0 %v229, 120
    %v235 = vpop.permute.xlu0 %234
    %v236 = vsel %vm119, %v233, %v235
    %v238 = vadd.f32 %v227, %v236
    %v239 = vmul.f32 %v125, %v188
    %v240 = vmul.f32 %v125, %v191
    %243 = vrot.lane.b32.xlu0 %v239, 126
    %v244 = vpop.permute.xlu0 %243
    %245 = vrot.lane.b32.xlu0 %v240, 126
    %v246 = vpop.permute.xlu0 %245
    %v247 = vsel %vm71, %v244, %v246
    %v250 = vadd.f32 %v193, %v247
    %v251 = vadd.f32 %v194, %v246
    %v252 = vmul.f32 %v142, %v188
    %v253 = vmul.f32 %v142, %v191
    %256 = vrot.lane.b32.xlu0 %v252, 124
    %v257 = vpop.permute.xlu0 %256
    %258 = vrot.lane.b32.xlu0 %v253, 124
    %v259 = vpop.permute.xlu0 %258
    %v260 = vsel %vm87, %v257, %v259
    %v263 = vadd.f32 %v250, %v260
    %v264 = vadd.f32 %v251, %v259
    %v265 = vmul.f32 %v159, %v188
    %v266 = vmul.f32 %v159, %v191
    %269 = vrot.lane.b32.xlu0 %v265, 122
    %v270 = vpop.permute.xlu0 %269
    %271 = vrot.lane.b32.xlu0 %v266, 122
    %v272 = vpop.permute.xlu0 %271
    %v273 = vsel %vm103, %v270, %v272
    %v276 = vadd.f32 %v263, %v273
    %v277 = vadd.f32 %v264, %v272
    %280 = vrot.lane.b32.xlu0 %v276, 127
    %v281 = vpop.permute.xlu0 %280
    %282 = vrot.lane.b32.xlu0 %v277, 127
    %v283 = vpop.permute.xlu0 %282
    %v284 = vsel %vm180, %v281, %v283
    %v286 = vadd.f32 %v238, %v284
    %s287 = scalar_lea.vmem [#allocation7], 8
    %288 = vst [vmem:[%s287] sm:$0xff] %v286
    // Predicated region
    $region18: #{tpu_custom_call.1} parent=1 // pred_check
      _
    $region19: #{tpu_custom_call.1} parent=1 // pred_check_branch
      %290 = sbr.rel (0) target = $region21
    $region20: #{tpu_custom_call.1} parent=1 // pred_region
      %292 = vsyncadd [#allocation4], 0
      %s293 = sshll.u32 [#allocation7], 4
      %s294 = int_to_ptr.vmem [resolvable:$true] %s293
      %s295 = sshll.u32 %s2, 4
      %s296 = int_to_ptr.hbm [resolvable:$true] %s295
      %301 = dma.vmem_to_hbm [thread:$0]  %s294, 256, %s296, [#allocation4], 128, 128, 8
    $region21: #{tpu_custom_call.1} parent=1 // pred_fallthru
      _
    // Predicated region
    $region22: #{tpu_custom_call.1} parent=1 // pred_check
      _
    $region23: #{tpu_custom_call.1} parent=1 // pred_check_branch
      %303 = sbr.rel (0) target = $region25
    $region24: #{tpu_custom_call.1} parent=1 // pred_region
      %305 = dma.done [#allocation4], 256
    $region25: #{tpu_custom_call.1} parent=1 // pred_fallthru
      _
    %306 = vsyncpa [#allocation3], 1
    %307 = vsyncpa [#allocation6], 1
    %308 = vsyncpa [#allocation4], 1

</llo_original>
